<compile_context>
chip_gen: v7x
topology: tpu7x:2x2x1
jax: 0.10.0
libtpu: 0.0.40
codegen_flags: <defaults>
</compile_context>

<pallas_src>
import jax
import jax.numpy as jnp
from jax import lax
from jax.experimental import pallas as pl
from jax.experimental.pallas import tpu as pltpu

LANES = 128
SUBLANES = 8


def _round_up(n, m):
    return (n + m - 1) // m * m


def _vmem_capacity_bytes():
    try:
        return int(pltpu.get_tpu_info().vmem_capacity_bytes)
    except Exception:
        return 64 << 20  # conservative (v7x-sized) fallback


def _make_fca_kernel(S_total, St, fused, ragged_last):
    """Build the kernel body for a block of logical shape (Bt, C, St)."""
    n_full = St // LANES
    rem = St - n_full * LANES
    unroll = True if n_full <= 16 else 8

    def _no_mask(chunk, start):
        return chunk

    def _accumulate(x_ref, acc_ref, mask_fn):
        # VALU-accumulate 128-lane chunks into acc_ref; the single cross-lane
        # (XLU) reduce happens once at the end, not per loaded vreg.
        def body(i, carry):
            off = pl.multiple_of(i * LANES, LANES)
            chunk = x_ref[:, :, pl.ds(off, LANES)].astype(jnp.float32)
            acc_ref[...] += mask_fn(chunk, off)
            return carry

        if n_full > 0:
            lax.fori_loop(0, n_full, body, 0, unroll=unroll)
        if rem > 0:
            tail = x_ref[:, :, n_full * LANES:St].astype(jnp.float32)
            acc_ref[:, :, :rem] += mask_fn(tail, n_full * LANES)

    def _scale_store(x_ref, o_ref, zb):
        # Chunked scale + store: short live ranges, lane-dense vst for the
        # full 128-lane chunks, stores can start early.
        def body(i, carry):
            off = pl.multiple_of(i * LANES, LANES)
            xs = x_ref[:, :, pl.ds(off, LANES)].astype(jnp.float32)
            o_ref[:, :, pl.ds(off, LANES)] = (xs * zb).astype(o_ref.dtype)
            return carry

        if n_full > 0:
            lax.fori_loop(0, n_full, body, 0, unroll=unroll)
        if rem > 0:
            xs = x_ref[:, :, n_full * LANES:St].astype(jnp.float32)
            o_ref[:, :, n_full * LANES:St] = (xs * zb[:, :, :rem]).astype(o_ref.dtype)

    def _excite(y, w1_ref, w2_ref):
        # Tiny MLP (dct scalar already folded into w1); leave it on the MXU.
        h = jnp.maximum(
            jnp.dot(y, w1_ref[...], preferred_element_type=jnp.float32), 0.0)
        return jax.nn.sigmoid(
            jnp.dot(h, w2_ref[...], preferred_element_type=jnp.float32))

    if fused:
        # Whole (Bt, C, S) row(s) per grid step: squeeze + excite + scale in one pass.
        def kernel(x_ref, w1_ref, w2_ref, o_ref, acc_ref):
            acc_ref[...] = jnp.zeros_like(acc_ref)
            _accumulate(x_ref, acc_ref, _no_mask)
            y = jnp.sum(acc_ref[...], axis=-1)                        # (Bt, C)
            z = _excite(y, w1_ref, w2_ref)                            # (Bt, C)
            # Hoist the lane-broadcast once (not per chunk).
            zb = jnp.broadcast_to(z[:, :, None], acc_ref.shape)
            _scale_store(x_ref, o_ref, zb)

        return kernel

    # S-tiled two-phase fallback for rows that do not fit the VMEM tile budget:
    # phase 0 streams the S tiles and accumulates the spatial sum, phase 1
    # re-streams them and writes the scaled output (1.5x HBM traffic total).
    def kernel(x_ref, w1_ref, w2_ref, o_ref, acc_ref):
        p = pl.program_id(1)          # 0 = squeeze phase, 1 = scale phase
        s = pl.program_id(2)          # S-tile index
        ns = pl.num_programs(2)

        @pl.when(p == 0)
        def _squeeze_phase():
            @pl.when(s == 0)
            def _():
                acc_ref[...] = jnp.zeros_like(acc_ref)

            if ragged_last:
                def mask_fn(chunk, start):
                    # Zero lanes beyond the true spatial extent; only the last
                    # S tile can run past S_total, elsewhere this is a no-op.
                    lane = lax.broadcasted_iota(jnp.int32, chunk.shape, 2)
                    limit = S_total - (s * St + start)
                    return jnp.where(lane < limit, chunk, 0.0)
            else:
                mask_fn = _no_mask

            _accumulate(x_ref, acc_ref, mask_fn)

            @pl.when(s == ns - 1)
            def _():
                y = jnp.sum(acc_ref[...], axis=-1)                    # (Bt, C)
                z = _excite(y, w1_ref, w2_ref)
                # acc_ref doubles as the carry of the channel scales into phase 1.
                acc_ref[...] = jnp.broadcast_to(z[:, :, None], acc_ref.shape)

        @pl.when(p == 1)
        def _scale_phase():
            _scale_store(x_ref, o_ref, acc_ref[...])

    return kernel


def fca_block(x, dct_weight, w1, w2, *, target_tile_bytes=None, donate_input=False):
    """FcaNet frequency-channel attention (5D variant).

    x          : (B, C, D, H, W)
    dct_weight : (1,)   nn.Parameter scalar
    w1         : (C, mid)  == torch Linear(C, mid, bias=False).weight.T
    w2         : (mid, C)  == torch Linear(mid, C, bias=False).weight.T
    """
    B, C, D, H, W = x.shape
    S = D * H * W
    mid = w1.shape[1]
    ebytes = jnp.dtype(x.dtype).itemsize

    # Fold the scalar dct weight into W1 (wrapper-side, tiny).
    w1s = w1.astype(jnp.float32) * dct_weight.astype(jnp.float32)[0]
    w2f = w2.astype(jnp.float32)

    # No wrapper-side padding/slicing passes: reshape of a contiguous array is free.
    x3 = x.reshape(B, C, S)

    # ---------------- generation-aware tiling --------------------------------
    vmem_cap = _vmem_capacity_bytes()
    if target_tile_bytes is None:
        # v7x (64 MiB VMEM/TC, ~3.2 TB/s HBM) amortizes the fixed per-step cost
        # better with ~10 MiB tiles; v5e/v6e are already DMA-bound at 4 MiB.
        target_tile_bytes = (10 << 20) if vmem_cap <= (80 << 20) else (4 << 20)
    usable_vmem = (vmem_cap * 7) // 10           # headroom for weights/scratch/temps
    tile_goal = min(int(target_tile_bytes), max(usable_vmem // 4, 1 << 20))

    C_sub = _round_up(C, SUBLANES)
    S_lane = _round_up(S, LANES)
    row_bytes = C_sub * S_lane * ebytes          # VMEM bytes of one full batch row

    fits = row_bytes <= tile_goal
    if fits:
        St = S
        Bt = max(1, min(B, tile_goal // row_bytes))
        # Keep >= min(B, 4) grid steps along batch (v7x has 2 TCs and the
        # pipeline needs >= 2 steps), without shrinking tiles below ~1 MiB.
        cap = max(1, B // min(B, 4))
        if cap * row_bytes < (1 << 20):
            cap = max(1, B // min(B, 2))
        Bt = min(Bt, cap)
    else:
        # A single row exceeds the tile budget: stream it in lane-aligned S
        # tiles (two-phase schedule, 1.5x HBM traffic, VMEM-safe).
        Bt = 1
        lanes_per_tile = max(1, tile_goal // (C_sub * LANES * ebytes))
        if lanes_per_tile * LANES >= S:
            # TODO(synk): channels alone exceed the tile budget; a channel-tiled
            # squeeze/scale would be needed - keep the whole row and rely on the
            # VMEM clamp instead.
            St = S
            fits = True
        else:
            St = lanes_per_tile * LANES

    num_b = -(-B // Bt)
    num_s = 1 if fits else -(-S // St)
    ragged_last = (num_s * St) > S
    grid = (num_b, 1 if fits else 2, num_s)

    # ---------------- VMEM budget (clamped to physical capacity) -------------
    tile_vmem = Bt * C_sub * _round_up(St, LANES) * ebytes
    w_vmem = (C_sub * _round_up(mid, LANES)
              + _round_up(mid, SUBLANES) * _round_up(C, LANES)) * 4
    acc_vmem = Bt * C_sub * LANES * 4
    # x + o double-buffered, weights double-buffered (tiny; pl.Buffered(1) would
    # shave a few KiB), scratch, plus slack for compiler temporaries.
    vmem_limit = 4 * tile_vmem + 2 * w_vmem + acc_vmem + (2 << 20)
    vmem_limit = int(min(max(vmem_limit, 16 << 20), vmem_cap))

    passes = 2 if fits else 3                    # x read (+ re-read) + o write
    cost = pl.CostEstimate(
        flops=int(2 * B * C * S + 4 * B * C * mid),
        transcendentals=int(B * C),
        bytes_accessed=int(passes * B * C * S * ebytes),
    )

    kernel = _make_fca_kernel(S, St, fits, ragged_last)

    out = pl.pallas_call(
        kernel,
        out_shape=jax.ShapeDtypeStruct((B, C, S), x.dtype),
        grid_spec=pltpu.PrefetchScalarGridSpec(
            num_scalar_prefetch=0,
            grid=grid,
            in_specs=[
                # Trailing block dims equal the full array dims -> legal for
                # ragged C / S without any wrapper padding.
                pl.BlockSpec((Bt, C, St), lambda b, p, s: (b, 0, s)),      # x
                pl.BlockSpec((C, mid), lambda b, p, s: (0, 0)),            # w1 (resident)
                pl.BlockSpec((mid, C), lambda b, p, s: (0, 0)),            # w2 (resident)
            ],
            # Phase 0 parks all output writes on block (b, 0, 0) (the index does
            # not change, so it is never flushed); phase 1 writes the real blocks.
            # In the fused path p == 0 and s == 0, so this is simply (b, 0, 0).
            out_specs=pl.BlockSpec((Bt, C, St), lambda b, p, s: (b, 0, s * p)),
            scratch_shapes=[pltpu.VMEM((Bt, C, LANES), jnp.float32)],
        ),
        compiler_params=pltpu.CompilerParams(
            dimension_semantics=("parallel", "arbitrary", "arbitrary"),
            vmem_limit_bytes=vmem_limit),
        cost_estimate=cost,
        # Aliasing x with the output halves HBM footprint, but forces XLA to
        # copy x whenever the caller still needs it - keep it opt-in.
        input_output_aliases=({0: 0} if donate_input else {}),
    )(x3, w1s, w2f)

    return out.reshape(B, C, D, H, W)


if __name__ == "__main__":
    key = jax.random.PRNGKey(0)

    def reference(x, dct_weight, w1, w2):
        y = jnp.sum(x * dct_weight[0], axis=(2, 3, 4))                  # (B, C)
        z = jax.nn.sigmoid(jnp.maximum(y @ w1, 0.0) @ w2)               # (B, C)
        return x * z[:, :, None, None, None]

    def run_case(k, B, C, D, H, W, reduction, **kwargs):
        mid = max(1, C // reduction)
        k1, k2, k3, k4 = jax.random.split(k, 4)
        x = jax.random.normal(k1, (B, C, D, H, W), dtype=jnp.float32)
        # Stored already-transposed relative to torch Linear.weight (out, in).
        w1 = jax.random.normal(k2, (C, mid), dtype=jnp.float32) * 0.1   # Linear(C, mid).weight.T
        w2 = jax.random.normal(k3, (mid, C), dtype=jnp.float32) * 0.1   # Linear(mid, C).weight.T
        dct = jax.random.uniform(k4, (1,), dtype=jnp.float32,
                                 minval=0.5, maxval=1.5)                # nn.Parameter(np.ones(1)) analogue
        out = jax.block_until_ready(fca_block(x, dct, w1, w2, **kwargs))
        ref = reference(x, dct, w1, w2)
        assert out.shape == x.shape and out.dtype == x.dtype
        err = float(jnp.max(jnp.abs(out - ref)))
        assert jnp.allclose(out, ref, atol=2e-5, rtol=2e-4), err

    ks = jax.random.split(key, 4)
    # 1) aligned, fused single-pass path: S = 4*8*8 = 256, C = 32
    run_case(ks[0], B=2, C=32, D=4, H=8, W=8, reduction=16)
    # 2) ragged shapes (C=36 not 8-aligned, S=75 not 128-aligned), still fused,
    #    with NO wrapper-side padding or output slicing.
    run_case(ks[1], B=3, C=36, D=3, H=5, W=5, reduction=16)
    # 3) forced S-tiled two-phase fallback with a ragged last S tile
    #    (S=300 -> St=128, 3 S-tiles, in-kernel lane masking).
    run_case(ks[2], B=2, C=16, D=3, H=10, W=10, reduction=8,
             target_tile_bytes=8 * 1024)
    # 4) batch-packed tiles with a ragged batch edge (B=9, Bt=4).
    run_case(ks[3], B=9, C=32, D=8, H=16, W=16, reduction=16)

    print("KERNEL_OK")
</pallas_src>

<mosaic_0001>
module attributes {stable_mosaic.version = 11 : i64} {
  func.func @kernel(%arg0: i32, %arg1: i32, %arg2: i32, %arg3: memref<1x32x256xf32, #tpu.memory_space<vmem>>, %arg4: memref<32x2xf32, #tpu.memory_space<vmem>>, %arg5: memref<2x32xf32, #tpu.memory_space<vmem>>, %arg6: memref<1x32x256xf32, #tpu.memory_space<vmem>>, %arg7: memref<1x32x128xf32, #tpu.memory_space<vmem>>) attributes {dimension_semantics = [#tpu.dimension_semantics<parallel>, #tpu.dimension_semantics<arbitrary>, #tpu.dimension_semantics<arbitrary>], iteration_bounds = array<i64: 2, 1, 1>, scalar_prefetch = 0 : i64, scratch_operands = 1 : i64, tpu.core_type = #tpu.core_type<tc>, window_params = [{transform_indices = @transform_0, window_bounds = array<i64: 1, 32, 256>}, {pipeline_mode = #tpu.pipeline_mode<synchronous>, transform_indices = @transform_1, window_bounds = array<i64: 32, 2>}, {pipeline_mode = #tpu.pipeline_mode<synchronous>, transform_indices = @transform_2, window_bounds = array<i64: 2, 32>}, {transform_indices = @transform_3, window_bounds = array<i64: 1, 32, 256>}]} {
    %cst = arith.constant 0.000000e+00 : f32
    %0 = vector.broadcast %cst : f32 to vector<1x32x128xf32>
    %c0 = arith.constant 0 : index
    %c0_0 = arith.constant 0 : index
    %c0_1 = arith.constant 0 : index
    %1 = vector.load %arg7[%c0, %c0_0, %c0_1] : memref<1x32x128xf32, #tpu.memory_space<vmem>>, vector<1x32x128xf32>
    tpu.vector_store %arg7[%c0, %c0_0, %c0_1], %0 {strides = array<i32>} : memref<1x32x128xf32, #tpu.memory_space<vmem>>, vector<1x32x128xf32>,
    %c0_i32 = arith.constant 0 : i32
    %c128_i32 = arith.constant 128 : i32
    %2 = arith.muli %c0_i32, %c128_i32 : i32
    %3 = tpu.assume_multiple %2, 128 : i32
    %c0_2 = arith.constant 0 : index
    %c0_3 = arith.constant 0 : index
    %4 = arith.index_cast %3 : i32 to index
    %5 = vector.load %arg3[%c0_2, %c0_3, %4] : memref<1x32x256xf32, #tpu.memory_space<vmem>>, vector<1x32x128xf32>
    %c0_4 = arith.constant 0 : index
    %c0_5 = arith.constant 0 : index
    %c0_6 = arith.constant 0 : index
    %6 = vector.load %arg7[%c0_4, %c0_5, %c0_6] : memref<1x32x128xf32, #tpu.memory_space<vmem>>, vector<1x32x128xf32>
    %7 = arith.addf %6, %5 : vector<1x32x128xf32>
    %c0_7 = arith.constant 0 : index
    %c0_8 = arith.constant 0 : index
    %c0_9 = arith.constant 0 : index
    %8 = vector.load %arg7[%c0_7, %c0_8, %c0_9] : memref<1x32x128xf32, #tpu.memory_space<vmem>>, vector<1x32x128xf32>
    tpu.vector_store %arg7[%c0_7, %c0_8, %c0_9], %7 {strides = array<i32>} : memref<1x32x128xf32, #tpu.memory_space<vmem>>, vector<1x32x128xf32>,
    %c1_i32 = arith.constant 1 : i32
    %c128_i32_10 = arith.constant 128 : i32
    %9 = arith.muli %c1_i32, %c128_i32_10 : i32
    %10 = tpu.assume_multiple %9, 128 : i32
    %c0_11 = arith.constant 0 : index
    %c0_12 = arith.constant 0 : index
    %11 = arith.index_cast %10 : i32 to index
    %12 = vector.load %arg3[%c0_11, %c0_12, %11] : memref<1x32x256xf32, #tpu.memory_space<vmem>>, vector<1x32x128xf32>
    %c0_13 = arith.constant 0 : index
    %c0_14 = arith.constant 0 : index
    %c0_15 = arith.constant 0 : index
    %13 = vector.load %arg7[%c0_13, %c0_14, %c0_15] : memref<1x32x128xf32, #tpu.memory_space<vmem>>, vector<1x32x128xf32>
    %14 = arith.addf %13, %12 : vector<1x32x128xf32>
    %c0_16 = arith.constant 0 : index
    %c0_17 = arith.constant 0 : index
    %c0_18 = arith.constant 0 : index
    %15 = vector.load %arg7[%c0_16, %c0_17, %c0_18] : memref<1x32x128xf32, #tpu.memory_space<vmem>>, vector<1x32x128xf32>
    tpu.vector_store %arg7[%c0_16, %c0_17, %c0_18], %14 {strides = array<i32>} : memref<1x32x128xf32, #tpu.memory_space<vmem>>, vector<1x32x128xf32>,
    %c2_i32 = arith.constant 2 : i32
    %c0_19 = arith.constant 0 : index
    %c0_20 = arith.constant 0 : index
    %c0_21 = arith.constant 0 : index
    %16 = vector.load %arg7[%c0_19, %c0_20, %c0_21] : memref<1x32x128xf32, #tpu.memory_space<vmem>>, vector<1x32x128xf32>
    %cst_22 = arith.constant dense<0.000000e+00> : vector<1x32xf32>
    %17 = vector.multi_reduction <add>, %16, %cst_22 [2] : vector<1x32x128xf32> to vector<1x32xf32>
    %c0_23 = arith.constant 0 : index
    %c0_24 = arith.constant 0 : index
    %18 = vector.load %arg4[%c0_23, %c0_24] : memref<32x2xf32, #tpu.memory_space<vmem>>, vector<32x2xf32>
    %cst_25 = arith.constant dense<0.000000e+00> : vector<1x2xf32>
    %19 = tpu.matmul %17, %18, %cst_25 {dimension_numbers = #tpu.dot_dimension_numbers<[1], [0], [0], [1], [0, 0, 1, 1], [], []>} : vector<1x32xf32>, vector<32x2xf32>, vector<1x2xf32> -> vector<1x2xf32>
    %cst_26 = arith.constant 0.000000e+00 : f32
    %20 = vector.broadcast %cst_26 : f32 to vector<1x2xf32>
    %21 = arith.maximumf %19, %20 : vector<1x2xf32>
    %c0_27 = arith.constant 0 : index
    %c0_28 = arith.constant 0 : index
    %22 = vector.load %arg5[%c0_27, %c0_28] : memref<2x32xf32, #tpu.memory_space<vmem>>, vector<2x32xf32>
    %cst_29 = arith.constant dense<0.000000e+00> : vector<1x32xf32>
    %23 = tpu.matmul %21, %22, %cst_29 {dimension_numbers = #tpu.dot_dimension_numbers<[1], [0], [0], [1], [0, 0, 1, 1], [], []>} : vector<1x2xf32>, vector<2x32xf32>, vector<1x32xf32> -> vector<1x32xf32>
    %24 = arith.negf %23 : vector<1x32xf32>
    %25 = math.exp %24 : vector<1x32xf32>
    %cst_30 = arith.constant 1.000000e+00 : f32
    %26 = vector.broadcast %cst_30 : f32 to vector<1x32xf32>
    %27 = arith.addf %26, %25 : vector<1x32xf32>
    %28 = arith.divf %26, %27 : vector<1x32xf32>
    %29 = vector.shape_cast %28 : vector<1x32xf32> to vector<1x32x1xf32>
    %30 = vector.shape_cast %29 : vector<1x32x1xf32> to vector<1x32x1xf32>
    %31 = vector.broadcast %30 : vector<1x32x1xf32> to vector<1x32x128xf32>
    %c0_i32_31 = arith.constant 0 : i32
    %c128_i32_32 = arith.constant 128 : i32
    %32 = arith.muli %c0_i32_31, %c128_i32_32 : i32
    %33 = tpu.assume_multiple %32, 128 : i32
    %c0_33 = arith.constant 0 : index
    %c0_34 = arith.constant 0 : index
    %34 = arith.index_cast %33 : i32 to index
    %35 = vector.load %arg3[%c0_33, %c0_34, %34] : memref<1x32x256xf32, #tpu.memory_space<vmem>>, vector<1x32x128xf32>
    %36 = arith.mulf %35, %31 : vector<1x32x128xf32>
    %c0_35 = arith.constant 0 : index
    %c0_36 = arith.constant 0 : index
    %37 = arith.index_cast %33 : i32 to index
    %38 = vector.load %arg6[%c0_35, %c0_36, %37] : memref<1x32x256xf32, #tpu.memory_space<vmem>>, vector<1x32x128xf32>
    tpu.vector_store %arg6[%c0_35, %c0_36, %37], %36 {strides = array<i32>} : memref<1x32x256xf32, #tpu.memory_space<vmem>>, vector<1x32x128xf32>,
    %c1_i32_37 = arith.constant 1 : i32
    %c128_i32_38 = arith.constant 128 : i32
    %39 = arith.muli %c1_i32_37, %c128_i32_38 : i32
    %40 = tpu.assume_multiple %39, 128 : i32
    %c0_39 = arith.constant 0 : index
    %c0_40 = arith.constant 0 : index
    %41 = arith.index_cast %40 : i32 to index
    %42 = vector.load %arg3[%c0_39, %c0_40, %41] : memref<1x32x256xf32, #tpu.memory_space<vmem>>, vector<1x32x128xf32>
    %43 = arith.mulf %42, %31 : vector<1x32x128xf32>
    %c0_41 = arith.constant 0 : index
    %c0_42 = arith.constant 0 : index
    %44 = arith.index_cast %40 : i32 to index
    %45 = vector.load %arg6[%c0_41, %c0_42, %44] : memref<1x32x256xf32, #tpu.memory_space<vmem>>, vector<1x32x128xf32>
    tpu.vector_store %arg6[%c0_41, %c0_42, %44], %43 {strides = array<i32>} : memref<1x32x256xf32, #tpu.memory_space<vmem>>, vector<1x32x128xf32>,
    %c2_i32_43 = arith.constant 2 : i32
    return
  }
  func.func @transform_0(%arg0: i32, %arg1: i32, %arg2: i32) -> (i32, i32, i32) {
    %c0_i32 = arith.constant 0 : i32
    %c0_i32_0 = arith.constant 0 : i32
    return %arg0, %c0_i32, %arg2 : i32, i32, i32
  }
  func.func @transform_1(%arg0: i32, %arg1: i32, %arg2: i32) -> (i32, i32) {
    %c0_i32 = arith.constant 0 : i32
    %c0_i32_0 = arith.constant 0 : i32
    %c0_i32_1 = arith.constant 0 : i32
    return %c0_i32, %c0_i32_0 : i32, i32
  }
  func.func @transform_2(%arg0: i32, %arg1: i32, %arg2: i32) -> (i32, i32) {
    %c0_i32 = arith.constant 0 : i32
    %c0_i32_0 = arith.constant 0 : i32
    %c0_i32_1 = arith.constant 0 : i32
    return %c0_i32, %c0_i32_0 : i32, i32
  }
  func.func @transform_3(%arg0: i32, %arg1: i32, %arg2: i32) -> (i32, i32, i32) {
    %0 = arith.muli %arg2, %arg1 : i32
    %c0_i32 = arith.constant 0 : i32
    %c0_i32_0 = arith.constant 0 : i32
    return %arg0, %c0_i32, %0 : i32, i32, i32
  }
}

</mosaic_0001>

<llo_original>
// kernel: tpu_custom_call.1
$region0: #{tpu_custom_call.1}
  #allocation0 [shape = 'u32[]', space=smem, size = 0x4, offset = 0x4, fixed_abs, tag = 'smem constant byte address 0x4 - core index']
  #allocation1 [shape = 'u32[144,128]{1,0:T(1,128)}', space=vmem, size = 0x12000, scoped, tag = 'internal scratch']
  #allocation2 [shape = 'f32[1,32,128]{2,1,0:T(8,128)}', space=vmem, size = 0x4000, scoped, tag = 'scratch operand']
  %s0 = inlined_call_operand.hbm [shape: f32[2,32,256], index: 0, kind: input, shape index: {}]
  %s1 = inlined_call_operand.vmem [shape: f32[32,2], index: 1, kind: input, shape index: {}]
  %s2 = inlined_call_operand.vmem [shape: f32[2,32], index: 2, kind: input, shape index: {}]
  %s3 = inlined_call_operand.hbm [shape: f32[2,32,256], index: 3, kind: output, shape index: {}]
  %s4 = sld [smem:[#allocation0]]
  $region49: #{tpu_custom_call.1} parent=0
    _
  %s6 = ssub.s32 1, %s4
  %s7 = scalar_select 0, %s6, %s4
  $region1: #{tpu_custom_call.1} parent=0
    #allocation3 [shape = 'u8[65536]{0}', space=vmem, size = 0x10000, scoped, tag = 'input window, operand 0']
    #allocation4 [shape = 's32[2]{0}', space=sflag, size = 0x8, scoped, tag = 'scoped memory for tpu_custom_call.1']
    #allocation5 [shape = 's32[2]{0}', space=sflag, size = 0x8, scoped, tag = 'scoped memory for tpu_custom_call.1']
    #allocation6 [shape = 'u8[65536]{0}', space=vmem, size = 0x10000, scoped, tag = 'output window, operand 0']
    %8 = vsyncpa [#allocation4], 0
    %s9 = scalar_lea.sflag [#allocation4], 1
    %10 = vsyncpa %s9, 0
    %11 = vsyncpa [#allocation5], 0
    %s12 = scalar_lea.sflag [#allocation5], 1
    %13 = vsyncpa %s12, 0
    loop: start=0, step=1, limit=4
    $region2: #{tpu_custom_call.1} parent=1 // loop_pre_header
      _
    $region3: #{tpu_custom_call.1} parent=1 // loop_header
      %s15 = sphi 0, %s19
      %p16 = scmp.ge.s32.totalorder %s15, 4
      %s22 = sphi 0, %s41
      %s23 = sphi 0, %s37
      %s24 = sphi 0, %s33
      %s25 = sphi 0, %s22
      %s26 = sphi 0, %s23
      %s27 = sphi 0, %s24
      %s28 = sphi 0, %s25
      %s29 = sphi 0, %s26
      %s30 = sphi 0, %s27
      %s46 = sphi 0, %s48
      %s49 = sphi 0, %s46
      %s50 = sphi 0, %s49
      %s66 = sphi 0, %s50
      %s70 = sphi 0, %s70
      %s72 = sphi 0, %s70
      %s73 = sphi 0, %s72
      %s87 = sphi 0, %s73
      %s91 = sphi 0, %s91
      %s93 = sphi 0, %s91
      %s94 = sphi 0, %s93
      %s108 = sphi 0, %s94
      %s118 = sphi 0, %s120
      %s121 = sphi 0, %s118
      %s122 = sphi 0, %s121
      %s138 = sphi 0, %s122
    $region4: #{tpu_custom_call.1} parent=1 // loop_header_branch
      %18 = sbr.rel (%p16) target = $region8
    $region5: #{tpu_custom_call.1} parent=1 // loop_body
      %s20 = ssub.s32 %s15, 1
      %s21 = ssub.s32 %s15, 2
      %s31 = sadd.s32 1, %s24
      %p32 = scmp.ge.s32.totalorder %s31, 1
      %s33 = scalar_select %p32, 0, %s31
      %s34 = sadd.s32 1, %s23
      %s35 = scalar_select %p32, %s34, %s23
      %p36 = scmp.ge.s32.totalorder %s35, 1
      %s37 = scalar_select %p36, 0, %s35
      %s38 = sadd.s32 1, %s22
      %s39 = scalar_select %p36, %s38, %s22
      %p40 = scmp.ge.s32.totalorder %s39, 2
      %s41 = scalar_select %p40, 0, %s39
      %s42 = ssub.s32 %s22, %s41
      %s43 = ssub.s32 %s24, %s33
      %s44 = sor.u32 %s42, %s43
      %p45 = scmp.eq.s32.totalorder %s44, 0
      %s47 = sadd.s32 %s46, 1
      %s48 = scalar_select %p45, %s46, %s47
      %p51 = pneg %p45
      %p52 = scmp.eq.s32.totalorder %s15, 1
      %p53 = por %p51, %p52
      %p54 = scmp.ne.s32.totalorder %s46, %s49
      %p55 = scmp.eq.s32.totalorder %s15, 0
      %p56 = por %p54, %p55
      %p57 = scmp.ne.s32.totalorder %s46, %s49
      %p58 = scmp.eq.s32.totalorder %s20, 1
      %p59 = por %p57, %p58
      %p60 = scmp.ne.s32.totalorder %s49, %s50
      %p61 = scmp.eq.s32.totalorder %s20, 0
      %p62 = por %p60, %p61
      %p63 = scmp.ne.s32.totalorder %s49, %s50
      %p64 = scmp.eq.s32.totalorder %s21, 1
      %p65 = por %p63, %p64
      %p67 = scmp.ne.s32.totalorder %s50, %s66
      %p68 = scmp.eq.s32.totalorder %s21, 0
      %p69 = por %p67, %p68
      %s71 = sadd.s32 %s70, 1
      %p74 = scmp.eq.s32.totalorder %s15, 1
      %p75 = scmp.ne.s32.totalorder %s70, %s72
      %p76 = scmp.eq.s32.totalorder %s15, 0
      %p77 = por %p75, %p76
      %p78 = scmp.ne.s32.totalorder %s70, %s72
      %p79 = scmp.eq.s32.totalorder %s20, 1
      %p80 = por %p78, %p79
      %p81 = scmp.ne.s32.totalorder %s72, %s73
      %p82 = scmp.eq.s32.totalorder %s20, 0
      %p83 = por %p81, %p82
      %p84 = scmp.ne.s32.totalorder %s72, %s73
      %p85 = scmp.eq.s32.totalorder %s21, 1
      %p86 = por %p84, %p85
      %p88 = scmp.ne.s32.totalorder %s73, %s87
      %p89 = scmp.eq.s32.totalorder %s21, 0
      %p90 = por %p88, %p89
      %s92 = sadd.s32 %s91, 1
      %p95 = scmp.eq.s32.totalorder %s15, 1
      %p96 = scmp.ne.s32.totalorder %s91, %s93
      %p97 = scmp.eq.s32.totalorder %s15, 0
      %p98 = por %p96, %p97
      %p99 = scmp.ne.s32.totalorder %s91, %s93
      %p100 = scmp.eq.s32.totalorder %s20, 1
      %p101 = por %p99, %p100
      %p102 = scmp.ne.s32.totalorder %s93, %s94
      %p103 = scmp.eq.s32.totalorder %s20, 0
      %p104 = por %p102, %p103
      %p105 = scmp.ne.s32.totalorder %s93, %s94
      %p106 = scmp.eq.s32.totalorder %s21, 1
      %p107 = por %p105, %p106
      %p109 = scmp.ne.s32.totalorder %s94, %s108
      %p110 = scmp.eq.s32.totalorder %s21, 0
      %p111 = por %p109, %p110
      %s112 = smul.u32 %s24, %s23
      %s113 = smul.u32 %s33, %s37
      %s114 = ssub.s32 %s22, %s41
      %s115 = ssub.s32 %s112, %s113
      %s116 = sor.u32 %s114, %s115
      %p117 = scmp.eq.s32.totalorder %s116, 0
      %s119 = sadd.s32 %s118, 1
      %s120 = scalar_select %p117, %s118, %s119
      %p123 = pneg %p117
      %p124 = scmp.eq.s32.totalorder %s15, 1
      %p125 = por %p123, %p124
      %p126 = scmp.ne.s32.totalorder %s118, %s121
      %p127 = scmp.eq.s32.totalorder %s15, 0
      %p128 = por %p126, %p127
      %p129 = scmp.ne.s32.totalorder %s118, %s121
      %p130 = scmp.eq.s32.totalorder %s20, 1
      %p131 = por %p129, %p130
      %p132 = scmp.ne.s32.totalorder %s121, %s122
      %p133 = scmp.eq.s32.totalorder %s20, 0
      %p134 = por %p132, %p133
      %p135 = scmp.ne.s32.totalorder %s121, %s122
      %p136 = scmp.eq.s32.totalorder %s21, 1
      %p137 = por %p135, %p136
      %p139 = scmp.ne.s32.totalorder %s122, %s138
      %p140 = scmp.eq.s32.totalorder %s21, 0
      %p141 = por %p139, %p140
      %p142 = scmp.le.s32.totalorder 1, %s15
      %p143 = scmp.lt.s32.totalorder %s15, 3
      %p144 = pnand %p142, %p143
      %p145 = pneg %p144
      // Predicated region
      $region9: #{tpu_custom_call.1} parent=5 // pred_check
        _
      $region10: #{tpu_custom_call.1} parent=5 // pred_check_branch
        %147 = sbr.rel (%p144) target = $region12
      $region11: #{tpu_custom_call.1} parent=5 // pred_region
        %s148 = ssub.s32 %s15, 1
        // Predicated region
        $region13: #{tpu_custom_call.1} parent=11 // pred_check
          %p149 = pneg %p83
        $region14: #{tpu_custom_call.1} parent=11 // pred_check_branch
          %151 = sbr.rel (%p149) target = $region16
        $region15: #{tpu_custom_call.1} parent=11 // pred_region
          _
        $region16: #{tpu_custom_call.1} parent=11 // pred_fallthru
          _
        // Predicated region
        $region17: #{tpu_custom_call.1} parent=11 // pred_check
          %p152 = pneg %p104
        $region18: #{tpu_custom_call.1} parent=11 // pred_check_branch
          %154 = sbr.rel (%p152) target = $region20
        $region19: #{tpu_custom_call.1} parent=11 // pred_region
          _
        $region20: #{tpu_custom_call.1} parent=11 // pred_fallthru
          _
      $region12: #{tpu_custom_call.1} parent=5 // pred_fallthru
        _
      %p155 = scmp.lt.s32.totalorder %s15, 2
      // Predicated region
      $region21: #{tpu_custom_call.1} parent=5 // pred_check
        %p156 = pneg %p155
      $region22: #{tpu_custom_call.1} parent=5 // pred_check_branch
        %158 = sbr.rel (%p156) target = $region24
      $region23: #{tpu_custom_call.1} parent=5 // pred_region
        // Predicated region
        $region25: #{tpu_custom_call.1} parent=23 // pred_check
          %p159 = pneg %p56
        $region26: #{tpu_custom_call.1} parent=23 // pred_check_branch
          %161 = sbr.rel (%p159) target = $region28
        $region27: #{tpu_custom_call.1} parent=23 // pred_region
          %s162 = sand.u32 %s46, 1
          %s163 = scalar_lea.sflag [#allocation4], %s162
          %s164 = sand.u32 %s46, 1
          %s165 = smul.addr %s164, 64
          %s166 = scalar_lea.vmem [#allocation3], %s165
          %s167 = smul.u32 2, %s24
          %s169 = ssub.s32 1024, 1024
          %170 = vsyncadd %s163, %s169
          %s171 = smul.addr %s22, 8
          %s172 = sadd.s32 %s167, %s171
          %s173 = smul.addr %s172, 128
          %s174 = scalar_lea.hbm %s0, %s173
          %s175 = sshll.u32 %s166, 4
          %s176 = int_to_ptr.vmem [resolvable:$true] %s175
          %181 = dma.hbm_to_vmem [thread:$0]  %s174, 1024, %s176, %s163, 256, 256, 16
        $region28: #{tpu_custom_call.1} parent=23 // pred_fallthru
          _
      $region24: #{tpu_custom_call.1} parent=5 // pred_fallthru
        _
      %p182 = scmp.le.s32.totalorder 1, %s15
      %p183 = scmp.lt.s32.totalorder %s15, 3
      %p184 = pnand %p182, %p183
      %p185 = pneg %p184
      // Predicated region
      $region29: #{tpu_custom_call.1} parent=5 // pred_check
        _
      $region30: #{tpu_custom_call.1} parent=5 // pred_check_branch
        %187 = sbr.rel (%p184) target = $region32
      $region31: #{tpu_custom_call.1} parent=5 // pred_region
        %s188 = ssub.s32 %s15, 1
        %s189 = sand.u32 %s49, 1
        %s190 = scalar_lea.sflag [#allocation4], %s189
        %s191 = sand.u32 %s49, 1
        %s192 = smul.addr %s191, 64
        %s193 = scalar_lea.vmem [#allocation3], %s192
        // Predicated region
        $region33: #{tpu_custom_call.1} parent=31 // pred_check
          %p194 = pneg %p62
        $region34: #{tpu_custom_call.1} parent=31 // pred_check_branch
          %196 = sbr.rel (%p194) target = $region36
        $region35: #{tpu_custom_call.1} parent=31 // pred_region
          %197 = dma.done %s190, 1024
        $region36: #{tpu_custom_call.1} parent=31 // pred_fallthru
          _
        %s198 = sand.u32 %s49, 1
        %s199 = scalar_lea.sflag [#allocation4], %s198
        %s200 = sand.u32 %s49, 1
        %s201 = smul.addr %s200, 64
        %s202 = scalar_lea.vmem [#allocation3], %s201
        %p203 = pneg %p62
        %p204 = pneg %p59
        %p205 = pneg %p83
        %p206 = pneg %p80
        %p207 = pneg %p104
        %p208 = pneg %p101
        %p209 = pneg %p134
        %p210 = pneg %p131
        %s211 = sand.u32 %s121, 1
        %s212 = scalar_lea.sflag [#allocation5], %s211
        %s213 = sand.u32 %s121, 1
        %s214 = smul.addr %s213, 64
        %s215 = scalar_lea.vmem [#allocation6], %s214
        %s216 = smul.u32 2, %s27
        %s217 = smul.u32 %s27, %s26
        %s218 = smul.u32 2, %s217
        %219 = vst [vmem:[#allocation2] sm:$0xff] 0.0
        %220 = vst [vmem:[#allocation2 + $0x8] sm:$0xff] 0.0
        %221 = vst [vmem:[#allocation2 + $0x10] sm:$0xff] 0.0
        %222 = vst [vmem:[#allocation2 + $0x18] sm:$0xff] 0.0
        %v223 = vld [vmem:[%s193] sm:$0xff]
        %v224 = vld [vmem:[%s193 + $0x10] sm:$0xff]
        %v225 = vld [vmem:[%s193 + $0x20] sm:$0xff]
        %v226 = vld [vmem:[%s193 + $0x30] sm:$0xff]
        %v227 = vld [vmem:[#allocation2] sm:$0xff]
        %v228 = vld [vmem:[#allocation2 + $0x8] sm:$0xff]
        %v229 = vld [vmem:[#allocation2 + $0x10] sm:$0xff]
        %v230 = vld [vmem:[#allocation2 + $0x18] sm:$0xff]
        %v231 = vadd.f32 %v227, %v223
        %v232 = vadd.f32 %v228, %v224
        %v233 = vadd.f32 %v229, %v225
        %v234 = vadd.f32 %v230, %v226
        %235 = vst [vmem:[#allocation2] sm:$0xff] %v231
        %236 = vst [vmem:[#allocation2 + $0x8] sm:$0xff] %v232
        %237 = vst [vmem:[#allocation2 + $0x10] sm:$0xff] %v233
        %238 = vst [vmem:[#allocation2 + $0x18] sm:$0xff] %v234
        %s239 = scalar_lea.vmem %s193, 8 [#allocation3]
        %v240 = vld [vmem:[%s239] sm:$0xff]
        %v241 = vld [vmem:[%s239 + $0x10] sm:$0xff]
        %v242 = vld [vmem:[%s239 + $0x20] sm:$0xff]
        %v243 = vld [vmem:[%s239 + $0x30] sm:$0xff]
        %v244 = vld [vmem:[#allocation2] sm:$0xff]
        %v245 = vld [vmem:[#allocation2 + $0x8] sm:$0xff]
        %v246 = vld [vmem:[#allocation2 + $0x10] sm:$0xff]
        %v247 = vld [vmem:[#allocation2 + $0x18] sm:$0xff]
        %v248 = vadd.f32 %v244, %v240
        %v249 = vadd.f32 %v245, %v241
        %v250 = vadd.f32 %v246, %v242
        %v251 = vadd.f32 %v247, %v243
        %252 = vst [vmem:[#allocation2] sm:$0xff] %v248
        %253 = vst [vmem:[#allocation2 + $0x8] sm:$0xff] %v249
        %254 = vst [vmem:[#allocation2 + $0x10] sm:$0xff] %v250
        %255 = vst [vmem:[#allocation2 + $0x18] sm:$0xff] %v251
        %v256 = vld [vmem:[#allocation2] sm:$0xff]
        %v257 = vld [vmem:[#allocation2 + $0x8] sm:$0xff]
        %v258 = vld [vmem:[#allocation2 + $0x10] sm:$0xff]
        %v259 = vld [vmem:[#allocation2 + $0x18] sm:$0xff]
        %260 = vadd.xlane.f32.xlu0 %v256
        %v261 = vpop.xlane.xlu0 %260
        %262 = vadd.xlane.f32.xlu0 %v257
        %v263 = vpop.xlane.xlu0 %262
        %264 = vadd.xlane.f32.xlu0 %v258
        %v265 = vpop.xlane.xlu0 %264
        %266 = vadd.xlane.f32.xlu0 %v259
        %v267 = vpop.xlane.xlu0 %266
        %v268 = vld [vmem:[%s1] sm:$0xff]
        %v269 = vld [vmem:[%s1 + $0x8] sm:$0xff]
        %v270 = vld [vmem:[%s1 + $0x10] sm:$0xff]
        %v271 = vld [vmem:[%s1 + $0x18] sm:$0xff]
        %v276 = vlaneseq
        %v277 = vand.u32 %v276, 127
        %v278 = vlaneseq
        %v279 = vshrl.u32 %v278, 7
        %v280 = vsub.s32 %v277, %v279
        %v281 = vrot.slane %v261, %v280
        %v282 = vadd.s32 %v277, 4294967288
        %v283 = vlaneseq
        %v284 = vshrl.u32 %v283, 7
        %v285 = vsub.s32 %v282, %v284
        %v286 = vrot.slane %v263, %v285
        %vm287 = vcmask 130112
        %v288 = vsel %vm287, %v286, %v281
        %v289 = vadd.s32 %v277, 4294967280
        %v290 = vlaneseq
        %v291 = vshrl.u32 %v290, 7
        %v292 = vsub.s32 %v289, %v291
        %v293 = vrot.slane %v265, %v292
        %vm294 = vcmask 195712
        %v295 = vsel %vm294, %v293, %v288
        %v296 = vadd.s32 %v277, 4294967272
        %v297 = vlaneseq
        %v298 = vshrl.u32 %v297, 7
        %v299 = vsub.s32 %v296, %v298
        %v300 = vrot.slane %v267, %v299
        %vm301 = vcmask 261312
        %v302 = vsel %vm301, %v300, %v295
        %vm303 = vcmask 261120
        %v304 = vsel %vm303, %v302, 0
        %306 = vmatprep.subr.mxu0 0.0
        %307 = vmatpush1.msra.mxu0 %v268
        %308 = vmatprep.subr.mxu0 0.0
        %309 = vmatpush1.msra.mxu0 %v269
        %310 = vmatprep.subr.mxu0 0.0
        %311 = vmatpush1.msra.mxu0 %v270
        %312 = vmatprep.subr.mxu0 0.0
        %313 = vmatpush1.msra.mxu0 %v271
        %314 = vmatprep.subr.mxu0 0.0
        %315 = vmatpush1.msra.mxu0 0.0
        %316 = vmatprep.subr.mxu0 0.0
        %317 = vmatpush1.msra.mxu0 0.0
        %318 = vmatprep.subr.mxu0 0.0
        %319 = vmatpush1.msra.mxu0 0.0
        %320 = vmatprep.subr.mxu0 0.0
        %321 = vmatpush1.msra.mxu0 0.0
        %322 = vmatprep.subr.mxu0 0.0
        %323 = vmatpush1.msra.mxu0 0.0
        %324 = vmatprep.subr.mxu0 0.0
        %325 = vmatpush1.msra.mxu0 0.0
        %326 = vmatprep.subr.mxu0 0.0
        %327 = vmatpush1.msra.mxu0 0.0
        %328 = vmatprep.subr.mxu0 0.0
        %329 = vmatpush1.msra.mxu0 0.0
        %330 = vmatprep.subr.mxu0 0.0
        %331 = vmatpush1.msra.mxu0 0.0
        %332 = vmatprep.subr.mxu0 0.0
        %333 = vmatpush1.msra.mxu0 0.0
        %334 = vmatprep.subr.mxu0 0.0
        %335 = vmatpush1.msra.mxu0 0.0
        %336 = vmatprep.subr.mxu0 0.0
        %337 = vmatpush1.msra.mxu0 0.0
        %338 = vmatprep.subr.mxu0 0.0
        %339 = vmatpush1.msra.mxu0 0.0
        %340 = vmatprep.subr.mxu0 0.0
        %341 = vmatpush1.msra.mxu0 0.0
        %342 = vmatprep.subr.mxu0 0.0
        %343 = vmatpush1.msra.mxu0 0.0
        %344 = vmatprep.subr.mxu0 0.0
        %345 = vmatpush1.msra.mxu0 0.0
        %346 = vmatprep.subr.mxu0 0.0
        %347 = vmatpush1.msra.mxu0 0.0
        %348 = vmatprep.subr.mxu0 0.0
        %349 = vmatpush1.msra.mxu0 0.0
        %350 = vmatprep.subr.mxu0 0.0
        %351 = vmatpush1.msra.mxu0 0.0
        %352 = vmatprep.subr.mxu0 0.0
        %353 = vmatpush1.msra.mxu0 0.0
        %354 = vmatprep.subr.mxu0 0.0
        %355 = vmatpush1.msra.mxu0 0.0
        %356 = vmatprep.subr.mxu0 0.0
        %357 = vmatpush1.msra.mxu0 0.0
        %358 = vmatprep.subr.mxu0 0.0
        %359 = vmatpush1.msra.mxu0 0.0
        %360 = vmatprep.subr.mxu0 0.0
        %361 = vmatpush1.msra.mxu0 0.0
        %362 = vmatprep.subr.mxu0 0.0
        %363 = vmatpush1.msra.mxu0 0.0
        %364 = vmatprep.subr.mxu0 0.0
        %365 = vmatpush1.msra.mxu0 0.0
        %366 = vmatprep.subr.mxu0 0.0
        %367 = vmatpush1.msra.mxu0 0.0
        %368 = vmatprep.subr.mxu0 0.0
        %369 = vmatpush1.msra.mxu0 0.0
        %370 = vmatprep.mubr.f32.mxu0 0.0
        %371 = vmatmul.mubr.f32.gmra.mrb[0].mxu0 %v304
        %v372 = vpop.f32.mrb[0].mxu0
        %v373 = vadd.f32 0.0, %v372
        %v374 = vpop.f32.mrb[0].mxu0
        %375 = vdwg.mxu0
        %v376 = vmax.f32 %v373, 0.0
        %v377 = vld [vmem:[%s2] sm:$0x3]
        %vm378 = vcmask 15360
        %v380 = vsel %vm378, %v376, 0
        %vm382 = vcmask 1041408
        %v384 = vsel %vm382, %v377, 0
        %386 = vmatprep.subr.mxu0 0.0
        %387 = vmatpush1.msra.mxu0 %v384
        %388 = vmatprep.subr.mxu0 0.0
        %389 = vmatpush1.msra.mxu0 0.0
        %390 = vmatprep.subr.mxu0 0.0
        %391 = vmatpush1.msra.mxu0 0.0
        %392 = vmatprep.subr.mxu0 0.0
        %393 = vmatpush1.msra.mxu0 0.0
        %394 = vmatprep.subr.mxu0 0.0
        %395 = vmatpush1.msra.mxu0 0.0
        %396 = vmatprep.subr.mxu0 0.0
        %397 = vmatpush1.msra.mxu0 0.0
        %398 = vmatprep.subr.mxu0 0.0
        %399 = vmatpush1.msra.mxu0 0.0
        %400 = vmatprep.subr.mxu0 0.0
        %401 = vmatpush1.msra.mxu0 0.0
        %402 = vmatprep.subr.mxu0 0.0
        %403 = vmatpush1.msra.mxu0 0.0
        %404 = vmatprep.subr.mxu0 0.0
        %405 = vmatpush1.msra.mxu0 0.0
        %406 = vmatprep.subr.mxu0 0.0
        %407 = vmatpush1.msra.mxu0 0.0
        %408 = vmatprep.subr.mxu0 0.0
        %409 = vmatpush1.msra.mxu0 0.0
        %410 = vmatprep.subr.mxu0 0.0
        %411 = vmatpush1.msra.mxu0 0.0
        %412 = vmatprep.subr.mxu0 0.0
        %413 = vmatpush1.msra.mxu0 0.0
        %414 = vmatprep.subr.mxu0 0.0
        %415 = vmatpush1.msra.mxu0 0.0
        %416 = vmatprep.subr.mxu0 0.0
        %417 = vmatpush1.msra.mxu0 0.0
        %418 = vmatprep.subr.mxu0 0.0
        %419 = vmatpush1.msra.mxu0 0.0
        %420 = vmatprep.subr.mxu0 0.0
        %421 = vmatpush1.msra.mxu0 0.0
        %422 = vmatprep.subr.mxu0 0.0
        %423 = vmatpush1.msra.mxu0 0.0
        %424 = vmatprep.subr.mxu0 0.0
        %425 = vmatpush1.msra.mxu0 0.0
        %426 = vmatprep.subr.mxu0 0.0
        %427 = vmatpush1.msra.mxu0 0.0
        %428 = vmatprep.subr.mxu0 0.0
        %429 = vmatpush1.msra.mxu0 0.0
        %430 = vmatprep.subr.mxu0 0.0
        %431 = vmatpush1.msra.mxu0 0.0
        %432 = vmatprep.subr.mxu0 0.0
        %433 = vmatpush1.msra.mxu0 0.0
        %434 = vmatprep.subr.mxu0 0.0
        %435 = vmatpush1.msra.mxu0 0.0
        %436 = vmatprep.subr.mxu0 0.0
        %437 = vmatpush1.msra.mxu0 0.0
        %438 = vmatprep.subr.mxu0 0.0
        %439 = vmatpush1.msra.mxu0 0.0
        %440 = vmatprep.subr.mxu0 0.0
        %441 = vmatpush1.msra.mxu0 0.0
        %442 = vmatprep.subr.mxu0 0.0
        %443 = vmatpush1.msra.mxu0 0.0
        %444 = vmatprep.subr.mxu0 0.0
        %445 = vmatpush1.msra.mxu0 0.0
        %446 = vmatprep.subr.mxu0 0.0
        %447 = vmatpush1.msra.mxu0 0.0
        %448 = vmatprep.subr.mxu0 0.0
        %449 = vmatpush1.msra.mxu0 0.0
        %450 = vmatprep.mubr.f32.mxu0 0.0
        %451 = vmatmul.mubr.f32.gmra.mrb[0].mxu0 %v380
        %v452 = vpop.f32.mrb[0].mxu0
        %v453 = vadd.f32 0.0, %v452
        %v454 = vpop.f32.mrb[0].mxu0
        %455 = vdwg.mxu0
        %v456 = vxor.u32 %v453, 2147483648
        %v457 = vmul.f32 %v456, 1.442695
        %v458 = vpow.pop %v457
        %v459 = vadd.f32 %v458, 1.0
        %v460 = vrcp.pop %v459
        %v461 = vmul.f32 1.0, %v460
        %v462 = vlaneseq
        %v463 = vshrl.u32 %v462, 7
        %v464 = vsub.s32 0, %v463
        %v465 = vrot.slane %v461, %v464
        %467 = vbcast.lane.b32.xlu0 %v465, 256
        %v468 = vpop.permute.xlu0 %467
        %s470 = sor.u32 256, 8
        %471 = vbcast.lane.b32.xlu0 %v465, %s470
        %v472 = vpop.permute.xlu0 %471
        %s474 = sor.u32 256, 16
        %475 = vbcast.lane.b32.xlu0 %v465, %s474
        %v476 = vpop.permute.xlu0 %475
        %s478 = sor.u32 256, 24
        %479 = vbcast.lane.b32.xlu0 %v465, %s478
        %v480 = vpop.permute.xlu0 %479
        %v481 = vld [vmem:[%s193] sm:$0xff]
        %v482 = vld [vmem:[%s193 + $0x10] sm:$0xff]
        %v483 = vld [vmem:[%s193 + $0x20] sm:$0xff]
        %v484 = vld [vmem:[%s193 + $0x30] sm:$0xff]
        %v485 = vmul.f32 %v481, %v468
        %v486 = vmul.f32 %v482, %v472
        %v487 = vmul.f32 %v483, %v476
        %v488 = vmul.f32 %v484, %v480
        %489 = vst [vmem:[%s215] sm:$0xff] %v485
        %490 = vst [vmem:[%s215 + $0x10] sm:$0xff] %v486
        %491 = vst [vmem:[%s215 + $0x20] sm:$0xff] %v487
        %492 = vst [vmem:[%s215 + $0x30] sm:$0xff] %v488
        %v493 = vld [vmem:[%s239] sm:$0xff]
        %v494 = vld [vmem:[%s239 + $0x10] sm:$0xff]
        %v495 = vld [vmem:[%s239 + $0x20] sm:$0xff]
        %v496 = vld [vmem:[%s239 + $0x30] sm:$0xff]
        %v497 = vmul.f32 %v493, %v468
        %v498 = vmul.f32 %v494, %v472
        %v499 = vmul.f32 %v495, %v476
        %v500 = vmul.f32 %v496, %v480
        %s501 = scalar_lea.vmem %s215, 8 [#allocation6]
        %502 = vst [vmem:[%s501] sm:$0xff] %v497
        %503 = vst [vmem:[%s501 + $0x10] sm:$0xff] %v498
        %504 = vst [vmem:[%s501 + $0x20] sm:$0xff] %v499
        %505 = vst [vmem:[%s501 + $0x30] sm:$0xff] %v500
        %s506 = sand.u32 %s121, 1
        %s507 = scalar_lea.sflag [#allocation5], %s506
        %s508 = sand.u32 %s121, 1
        %s509 = smul.addr %s508, 64
        %s510 = scalar_lea.vmem [#allocation6], %s509
        // Predicated region
        $region37: #{tpu_custom_call.1} parent=31 // pred_check
          %p511 = pneg %p131
        $region38: #{tpu_custom_call.1} parent=31 // pred_check_branch
          %513 = sbr.rel (%p511) target = $region40
        $region39: #{tpu_custom_call.1} parent=31 // pred_region
          %s514 = smul.u32 %s27, %s26
          %s515 = smul.u32 2, %s514
          %s517 = ssub.s32 1024, 1024
          %518 = vsyncadd %s507, %s517
          %s519 = smul.addr %s25, 8
          %s520 = sadd.s32 %s515, %s519
          %s521 = smul.addr %s520, 128
          %s522 = scalar_lea.hbm %s3, %s521
          %s523 = sshll.u32 %s510, 4
          %s524 = int_to_ptr.vmem [resolvable:$true] %s523
          %529 = dma.vmem_to_hbm [thread:$0]  %s524, 1024, %s522, %s507, 256, 256, 16
        $region40: #{tpu_custom_call.1} parent=31 // pred_fallthru
          _
      $region32: #{tpu_custom_call.1} parent=5 // pred_fallthru
        _
      %p530 = scmp.le.s32.totalorder 2, %s15
      // Predicated region
      $region41: #{tpu_custom_call.1} parent=5 // pred_check
        %p531 = pneg %p530
      $region42: #{tpu_custom_call.1} parent=5 // pred_check_branch
        %533 = sbr.rel (%p531) target = $region44
      $region43: #{tpu_custom_call.1} parent=5 // pred_region
        %s534 = ssub.s32 %s15, 2
        // Predicated region
        $region45: #{tpu_custom_call.1} parent=43 // pred_check
          %p535 = pneg %p137
        $region46: #{tpu_custom_call.1} parent=43 // pred_check_branch
          %537 = sbr.rel (%p535) target = $region48
        $region47: #{tpu_custom_call.1} parent=43 // pred_region
          %s538 = sand.u32 %s122, 1
          %s539 = scalar_lea.sflag [#allocation5], %s538
          %s540 = sand.u32 %s122, 1
          %s541 = smul.addr %s540, 64
          %s542 = scalar_lea.vmem [#allocation6], %s541
          %543 = dma.done %s539, 1024
        $region48: #{tpu_custom_call.1} parent=43 // pred_fallthru
          _
      $region44: #{tpu_custom_call.1} parent=5 // pred_fallthru
        _
    $region6: #{tpu_custom_call.1} parent=1 // loop_footer
      %s19 = sadd.s32 1, %s15
    $region7: #{tpu_custom_call.1} parent=1 // loop_footer_branch
      %14 = sbr.rel target = $region3
    $region8: #{tpu_custom_call.1} parent=1 // loop_exit
      _
    %544 = vsyncpa [#allocation4], 1
    %s545 = scalar_lea.sflag [#allocation4], 1
    %546 = vsyncpa %s545, 1
    %547 = vsyncpa [#allocation5], 1
    %s548 = scalar_lea.sflag [#allocation5], 1
    %549 = vsyncpa %s548, 1

</llo_original>
